<compile_context>
chip_gen: v7x
topology: tpu7x:2x2x1
jax: 0.10.0
libtpu: 0.0.40
codegen_flags: <defaults>
</compile_context>

<pallas_src>
import numpy as np
import jax
import jax.numpy as jnp
from jax.experimental import pallas as pl
from jax.experimental.pallas import tpu as pltpu

_NEG_PAD = -1e30     # fill for padded class columns (vanishes from every softmax)
_NEG_TGT = -30.0     # SHIKE's target-class suppression constant


def _make_shike_kernel(num_experts, batch_true, kl_scale=10.0):
    E = num_experts
    inv_b = 1.0 / float(batch_true)

    def _log_softmax(x):
        m = jnp.max(x, axis=-1, keepdims=True)
        z = x - m
        return z - jnp.log(jnp.sum(jnp.exp(z), axis=-1, keepdims=True))

    def _log_softmax_and_softmax(x):
        # one exp pass and one sum reduction shared by log-probs and probs
        m = jnp.max(x, axis=-1, keepdims=True)
        z = x - m
        e = jnp.exp(z)
        s = jnp.sum(e, axis=-1, keepdims=True)
        return z - jnp.log(s), e / s

    def kernel(balance_ref, labels_ref, *refs):
        logit_refs = refs[:E]
        logdis_ref = refs[E]
        out_ref = refs[E + 1]

        TB, Cp = logit_refs[0].shape
        lab = labels_ref[...]                                   # [TB, 1] int32 (-1 = pad row)
        col = jax.lax.broadcasted_iota(jnp.int32, (TB, Cp), 1)
        labels = (col == lab).astype(jnp.float32)               # one-hot built on-chip
        outs = [r[...] for r in logit_refs]                     # E x [TB, Cp] f32

        def write_partial(pointwise):
            partial = jnp.sum(pointwise) * inv_b                # single reduction per branch
            out_ref[...] = jnp.zeros(out_ref.shape, jnp.float32) + partial

        # ---- balanced branch (epoch >= cornerstone): logit adjustment -------
        @pl.when(balance_ref[0] > 0)
        def _balanced():
            logdis = logdis_ref[...]                            # [1, Cp]
            acc = jnp.zeros((TB, Cp), jnp.float32)
            for o in outs:
                acc = acc - labels * _log_softmax(o + logdis)
            write_partial(acc)

        # ---- unbalanced branch (epoch < cornerstone): CE + distillation -----
        @pl.when(balance_ref[0] == 0)
        def _unbalanced():
            nt = 1.0 - labels

            logsm, sm = [], []
            for o in outs:
                ls, p = _log_softmax_and_softmax(o)
                logsm.append(ls)
                sm.append(p)
            sum_logsm = logsm[0]
            for ls in logsm[1:]:
                sum_logsm = sum_logsm + ls

            # teacher statistics over experts
            max_tea = outs[0]
            sum_logits = outs[0]
            for o in outs[1:]:
                max_tea = jnp.maximum(max_tea, o)
                sum_logits = sum_logits + o
            avg_logits = sum_logits * (1.0 / float(E))

            # hardest non-target class (first argmax, matches torch.max + scatter_)
            nt_logits = _NEG_TGT * labels + avg_logits * nt
            hn_max = jnp.max(nt_logits, axis=-1, keepdims=True)
            hn_idx = jnp.min(jnp.where(nt_logits == hn_max, col, Cp),
                             axis=-1, keepdims=True)
            hardest = (col == hn_idx).astype(jnp.float32)

            reformed_nt = max_tea * (1.0 - hardest) * nt + nt_logits * hardest
            log_srnt, srnt = _log_softmax_and_softmax(reformed_nt)   # loop-invariant KL target

            sum_rnt = _log_softmax(outs[0] * nt + _NEG_TGT * labels)
            for o in outs[1:]:
                sum_rnt = sum_rnt + _log_softmax(o * nt + _NEG_TGT * labels)

            # single pointwise accumulator
            acc = -labels * sum_logsm                            # sum_i soft-CE(outs[i], labels)
            # 10 * sum_i KL(reformed_non_targets[i] || srnt) = 10 * srnt*(E*log(srnt) - sum_i rnt_i)
            acc = acc + kl_scale * jnp.where(
                srnt > 0.0, srnt * (float(E) * log_srnt - sum_rnt), 0.0)
            # pairwise KL: sum_{i!=j} sm_j*(log sm_j - log sm_i) = sum_j sm_j*(E*log sm_j - sum_logsm)
            for j in range(E):
                acc = acc + jnp.where(
                    sm[j] > 0.0,
                    sm[j] * (float(E) * logsm[j] - sum_logsm), 0.0)
            write_partial(acc)

    return kernel


def shike_loss(outputs, label, epoch, label_dis, num_class, cornerstone=180):
    """outputs: list of E [B, C] arrays; label: [B] int; epoch: int scalar."""
    E = len(outputs)
    B, C = outputs[0].shape
    assert C == num_class

    # lane-dense class padding; batch padded up to the row-tile size
    Cp = ((C + 127) // 128) * 128
    TB = min(128, ((B + 7) // 8) * 8)
    Bp = ((B + TB - 1) // TB) * TB
    NB = Bp // TB

    def pad_logits(o):
        o = o.astype(jnp.float32)
        o = jnp.pad(o, ((0, 0), (0, Cp - C)), constant_values=_NEG_PAD)
        return jnp.pad(o, ((0, Bp - B), (0, 0)), constant_values=0.0)

    logits = [pad_logits(o) for o in outputs]
    lab = jnp.pad(jnp.asarray(label, jnp.int32), (0, Bp - B), constant_values=-1)
    lab = lab.reshape(Bp, 1)
    # TODO(synk): label_dis entries of 0 give log(-inf) exactly as the torch reference does.
    logdis = jnp.log(jnp.asarray(label_dis, jnp.float32))
    logdis = jnp.pad(logdis, (0, Cp - C), constant_values=0.0).reshape(1, Cp)
    balance = (jnp.asarray(epoch, jnp.int32) >= cornerstone).astype(jnp.int32).reshape(1)

    kernel = _make_shike_kernel(E, B)
    row_spec = pl.BlockSpec((TB, Cp), lambda b, bal: (b, 0))
    out = pl.pallas_call(
        kernel,
        out_shape=jax.ShapeDtypeStruct((NB, 8, 128), jnp.float32),
        grid_spec=pltpu.PrefetchScalarGridSpec(
            num_scalar_prefetch=1,                                  # balance flag -> SMEM
            grid=(NB,),
            in_specs=[pl.BlockSpec((TB, 1), lambda b, bal: (b, 0))]     # int labels
                     + [row_spec] * E                                    # expert logits
                     + [pl.BlockSpec((1, Cp), lambda b, bal: (0, 0))],   # log(label_dis)
            out_specs=pl.BlockSpec((1, 8, 128), lambda b, bal: (b, 0, 0)),
        ),
        compiler_params=pltpu.CompilerParams(
            dimension_semantics=("parallel",)),    # independent batch blocks (v7x: 2 TCs)
    )(balance, lab, *logits, logdis)
    return jnp.sum(out[:, 0, 0])


def _shike_loss_ref(outputs, label, epoch, label_dis, num_class, cornerstone=180):
    """Pure-JAX reference mirroring the torch module (forward only)."""
    outs = [o.astype(jnp.float32) for o in outputs]
    E = len(outs)
    B = outs[0].shape[0]
    labels = jax.nn.one_hot(label, num_class, dtype=jnp.float32)
    logdis = jnp.log(jnp.asarray(label_dis, jnp.float32))[None, :]

    def lsm(x): return jax.nn.log_softmax(x, axis=-1)
    def smx(x): return jax.nn.softmax(x, axis=-1)
    def soft_ent(i, t): return jnp.mean(jnp.sum(-t * lsm(i), axis=1))
    def kld(log_in, tgt):
        return jnp.sum(jnp.where(tgt > 0, tgt * (jnp.log(tgt) - log_in), 0.0)) / B

    if epoch >= cornerstone:
        return sum(soft_ent(o + logdis, labels) for o in outs)

    nt = 1.0 - labels
    max_tea = outs[0]
    s = outs[0]
    for o in outs[1:]:
        max_tea = jnp.maximum(max_tea, o)
        s = s + o
    avg = s / E
    ntl = _NEG_TGT * labels + avg * nt
    hardest = jax.nn.one_hot(jnp.argmax(ntl, axis=1), num_class, dtype=jnp.float32)
    reformed_nt = max_tea * (1 - hardest) * nt + ntl * hardest
    srnt = smx(reformed_nt)
    loss = 0.0
    for i in range(E):
        loss += soft_ent(outs[i], labels)
        loss += 10.0 * kld(lsm(outs[i] * nt + _NEG_TGT * labels), srnt)
        for j in range(E):
            if i != j:
                loss += kld(lsm(outs[i]), smx(outs[j]))
    return loss


if __name__ == "__main__":
    # Synthetic SHIKELoss config (mirrors __init__): deterministic, in-script.
    num_class = 32
    num_max = 100
    imb_ratio = 10
    imb_factor = 1.0 / imb_ratio
    cls_num_list = [100 - 2 * i for i in range(num_class)]
    label_dis = np.array(
        [int(np.floor(num_max * imb_factor ** (i / (cls_num_list[i] + 1.0))))
         for i in range(num_class)])

    B, E = 8, 3   # batch, number of expert heads
    key = jax.random.PRNGKey(0)
    keys = jax.random.split(key, E + 1)
    outputs = [jax.random.normal(keys[i], (B, num_class), jnp.float32) for i in range(E)]
    label = jax.random.randint(keys[E], (B,), 0, num_class)

    # exercise both branches of the loss (before / after the cornerstone epoch)
    loss_early = shike_loss(outputs, label, epoch=10,
                            label_dis=label_dis, num_class=num_class)
    loss_late = shike_loss(outputs, label, epoch=200,
                           label_dis=label_dis, num_class=num_class)
    jax.block_until_ready((loss_early, loss_late))

    ref_early = _shike_loss_ref(outputs, label, 10, label_dis, num_class)
    ref_late = _shike_loss_ref(outputs, label, 200, label_dis, num_class)
    np.testing.assert_allclose(np.asarray(loss_early), np.asarray(ref_early),
                               rtol=1e-3, atol=1e-3)
    np.testing.assert_allclose(np.asarray(loss_late), np.asarray(ref_late),
                               rtol=1e-3, atol=1e-3)
    print("KERNEL_OK")
</pallas_src>

<mosaic_0001>
module attributes {stable_mosaic.version = 11 : i64} {
  func.func @kernel(%arg0: i32, %arg1: memref<1xi32, #tpu.memory_space<smem>>, %arg2: memref<8x1xi32, #tpu.memory_space<vmem>>, %arg3: memref<8x128xf32, #tpu.memory_space<vmem>>, %arg4: memref<8x128xf32, #tpu.memory_space<vmem>>, %arg5: memref<8x128xf32, #tpu.memory_space<vmem>>, %arg6: memref<1x128xf32, #tpu.memory_space<vmem>>, %arg7: memref<1x8x128xf32, #tpu.memory_space<vmem>>) attributes {dimension_semantics = [#tpu.dimension_semantics<parallel>], iteration_bounds = array<i64: 1>, scalar_prefetch = 1 : i64, scratch_operands = 0 : i64, tpu.core_type = #tpu.core_type<tc>, window_params = [{transform_indices = @transform_0, window_bounds = array<i64: 8, 1>}, {transform_indices = @transform_1, window_bounds = array<i64: 8, 128>}, {transform_indices = @transform_2, window_bounds = array<i64: 8, 128>}, {transform_indices = @transform_3, window_bounds = array<i64: 8, 128>}, {pipeline_mode = #tpu.pipeline_mode<synchronous>, transform_indices = @transform_4, window_bounds = array<i64: 1, 128>}, {transform_indices = @transform_5, window_bounds = array<i64: 1, 8, 128>}]} {
    %c0 = arith.constant 0 : index
    %c0_0 = arith.constant 0 : index
    %0 = vector.load %arg2[%c0, %c0_0] : memref<8x1xi32, #tpu.memory_space<vmem>>, vector<8x1xi32>
    %1 = tpu.iota {dimensions = array<i32: 1>} : vector<8x128xi32>
    %2 = vector.broadcast %0 : vector<8x1xi32> to vector<8x128xi32>
    %3 = arith.cmpi eq, %1, %2 : vector<8x128xi32>
    %4 = arith.extui %3 : vector<8x128xi1> to vector<8x128xi32>
    %5 = arith.sitofp %4 : vector<8x128xi32> to vector<8x128xf32>
    %c0_1 = arith.constant 0 : index
    %c0_2 = arith.constant 0 : index
    %6 = vector.load %arg3[%c0_1, %c0_2] : memref<8x128xf32, #tpu.memory_space<vmem>>, vector<8x128xf32>
    %c0_3 = arith.constant 0 : index
    %c0_4 = arith.constant 0 : index
    %7 = vector.load %arg4[%c0_3, %c0_4] : memref<8x128xf32, #tpu.memory_space<vmem>>, vector<8x128xf32>
    %c0_5 = arith.constant 0 : index
    %c0_6 = arith.constant 0 : index
    %8 = vector.load %arg5[%c0_5, %c0_6] : memref<8x128xf32, #tpu.memory_space<vmem>>, vector<8x128xf32>
    %c0_7 = arith.constant 0 : index
    %9 = memref.load %arg1[%c0_7] : memref<1xi32, #tpu.memory_space<smem>>
    %c0_i32 = arith.constant 0 : i32
    %10 = arith.cmpi sgt, %9, %c0_i32 : i32
    %11 = arith.extui %10 : i1 to i32
    %c0_i32_8 = arith.constant 0 : i32
    %12 = arith.cmpi ne, %11, %c0_i32_8 : i32
    scf.if %12 {
      %c0_12 = arith.constant 0 : index
      %c0_13 = arith.constant 0 : index
      %17 = vector.load %arg6[%c0_12, %c0_13] : memref<1x128xf32, #tpu.memory_space<vmem>>, vector<1x128xf32>
      %cst = arith.constant 0.000000e+00 : f32
      %18 = vector.broadcast %cst : f32 to vector<8x128xf32>
      %19 = vector.broadcast %17 : vector<1x128xf32> to vector<8x128xf32>
      %20 = arith.addf %6, %19 : vector<8x128xf32>
      %cst_14 = arith.constant dense<0xFF800000> : vector<8xf32>
      %21 = vector.multi_reduction <maximumf>, %20, %cst_14 [1] : vector<8x128xf32> to vector<8xf32>
      %22 = vector.shape_cast %21 : vector<8xf32> to vector<8x1xf32>
      %23 = vector.broadcast %22 : vector<8x1xf32> to vector<8x128xf32>
      %24 = arith.subf %20, %23 : vector<8x128xf32>
      %25 = math.exp %24 : vector<8x128xf32>
      %cst_15 = arith.constant dense<0.000000e+00> : vector<8xf32>
      %26 = vector.multi_reduction <add>, %25, %cst_15 [1] : vector<8x128xf32> to vector<8xf32>
      %27 = vector.shape_cast %26 : vector<8xf32> to vector<8x1xf32>
      %28 = math.log %27 : vector<8x1xf32>
      %29 = vector.broadcast %28 : vector<8x1xf32> to vector<8x128xf32>
      %30 = arith.subf %24, %29 : vector<8x128xf32>
      %31 = arith.mulf %5, %30 : vector<8x128xf32>
      %32 = arith.subf %18, %31 : vector<8x128xf32>
      %33 = vector.broadcast %17 : vector<1x128xf32> to vector<8x128xf32>
      %34 = arith.addf %7, %33 : vector<8x128xf32>
      %cst_16 = arith.constant dense<0xFF800000> : vector<8xf32>
      %35 = vector.multi_reduction <maximumf>, %34, %cst_16 [1] : vector<8x128xf32> to vector<8xf32>
      %36 = vector.shape_cast %35 : vector<8xf32> to vector<8x1xf32>
      %37 = vector.broadcast %36 : vector<8x1xf32> to vector<8x128xf32>
      %38 = arith.subf %34, %37 : vector<8x128xf32>
      %39 = math.exp %38 : vector<8x128xf32>
      %cst_17 = arith.constant dense<0.000000e+00> : vector<8xf32>
      %40 = vector.multi_reduction <add>, %39, %cst_17 [1] : vector<8x128xf32> to vector<8xf32>
      %41 = vector.shape_cast %40 : vector<8xf32> to vector<8x1xf32>
      %42 = math.log %41 : vector<8x1xf32>
      %43 = vector.broadcast %42 : vector<8x1xf32> to vector<8x128xf32>
      %44 = arith.subf %38, %43 : vector<8x128xf32>
      %45 = arith.mulf %5, %44 : vector<8x128xf32>
      %46 = arith.subf %32, %45 : vector<8x128xf32>
      %47 = vector.broadcast %17 : vector<1x128xf32> to vector<8x128xf32>
      %48 = arith.addf %8, %47 : vector<8x128xf32>
      %cst_18 = arith.constant dense<0xFF800000> : vector<8xf32>
      %49 = vector.multi_reduction <maximumf>, %48, %cst_18 [1] : vector<8x128xf32> to vector<8xf32>
      %50 = vector.shape_cast %49 : vector<8xf32> to vector<8x1xf32>
      %51 = vector.broadcast %50 : vector<8x1xf32> to vector<8x128xf32>
      %52 = arith.subf %48, %51 : vector<8x128xf32>
      %53 = math.exp %52 : vector<8x128xf32>
      %cst_19 = arith.constant dense<0.000000e+00> : vector<8xf32>
      %54 = vector.multi_reduction <add>, %53, %cst_19 [1] : vector<8x128xf32> to vector<8xf32>
      %55 = vector.shape_cast %54 : vector<8xf32> to vector<8x1xf32>
      %56 = math.log %55 : vector<8x1xf32>
      %57 = vector.broadcast %56 : vector<8x1xf32> to vector<8x128xf32>
      %58 = arith.subf %52, %57 : vector<8x128xf32>
      %59 = arith.mulf %5, %58 : vector<8x128xf32>
      %60 = arith.subf %46, %59 : vector<8x128xf32>
      %61 = vector.shape_cast %60 : vector<8x128xf32> to vector<1x8x128xf32>
      %cst_20 = arith.constant dense<0.000000e+00> : vector<1xf32>
      %62 = vector.multi_reduction <add>, %61, %cst_20 [1, 2] : vector<1x8x128xf32> to vector<1xf32>
      %63 = vector.shape_cast %62 : vector<1xf32> to vector<1x1x1xf32>
      %64 = vector.extract %63[0, 0, 0] : f32 from vector<1x1x1xf32>
      %cst_21 = arith.constant 1.250000e-01 : f32
      %65 = arith.mulf %64, %cst_21 : f32
      %cst_22 = arith.constant 0.000000e+00 : f32
      %66 = vector.broadcast %cst_22 : f32 to vector<1x8x128xf32>
      %67 = vector.broadcast %65 : f32 to vector<1x8x128xf32>
      %68 = arith.addf %66, %67 : vector<1x8x128xf32>
      %c0_23 = arith.constant 0 : index
      %c0_24 = arith.constant 0 : index
      %c0_25 = arith.constant 0 : index
      %69 = vector.load %arg7[%c0_23, %c0_24, %c0_25] : memref<1x8x128xf32, #tpu.memory_space<vmem>>, vector<1x8x128xf32>
      tpu.vector_store %arg7[%c0_23, %c0_24, %c0_25], %68 {strides = array<i32>} : memref<1x8x128xf32, #tpu.memory_space<vmem>>, vector<1x8x128xf32>,
    } else {
    }
    %c0_9 = arith.constant 0 : index
    %13 = memref.load %arg1[%c0_9] : memref<1xi32, #tpu.memory_space<smem>>
    %c0_i32_10 = arith.constant 0 : i32
    %14 = arith.cmpi eq, %13, %c0_i32_10 : i32
    %15 = arith.extui %14 : i1 to i32
    %c0_i32_11 = arith.constant 0 : i32
    %16 = arith.cmpi ne, %15, %c0_i32_11 : i32
    scf.if %16 {
      %cst = arith.constant 1.000000e+00 : f32
      %17 = vector.broadcast %cst : f32 to vector<8x128xf32>
      %18 = arith.subf %17, %5 : vector<8x128xf32>
      %cst_12 = arith.constant dense<0xFF800000> : vector<8xf32>
      %19 = vector.multi_reduction <maximumf>, %6, %cst_12 [1] : vector<8x128xf32> to vector<8xf32>
      %20 = vector.shape_cast %19 : vector<8xf32> to vector<8x1xf32>
      %21 = vector.broadcast %20 : vector<8x1xf32> to vector<8x128xf32>
      %22 = arith.subf %6, %21 : vector<8x128xf32>
      %23 = math.exp %22 : vector<8x128xf32>
      %cst_13 = arith.constant dense<0.000000e+00> : vector<8xf32>
      %24 = vector.multi_reduction <add>, %23, %cst_13 [1] : vector<8x128xf32> to vector<8xf32>
      %25 = vector.shape_cast %24 : vector<8xf32> to vector<8x1xf32>
      %26 = math.log %25 : vector<8x1xf32>
      %27 = vector.broadcast %26 : vector<8x1xf32> to vector<8x128xf32>
      %28 = arith.subf %22, %27 : vector<8x128xf32>
      %29 = vector.broadcast %25 : vector<8x1xf32> to vector<8x128xf32>
      %30 = arith.divf %23, %29 : vector<8x128xf32>
      %cst_14 = arith.constant dense<0xFF800000> : vector<8xf32>
      %31 = vector.multi_reduction <maximumf>, %7, %cst_14 [1] : vector<8x128xf32> to vector<8xf32>
      %32 = vector.shape_cast %31 : vector<8xf32> to vector<8x1xf32>
      %33 = vector.broadcast %32 : vector<8x1xf32> to vector<8x128xf32>
      %34 = arith.subf %7, %33 : vector<8x128xf32>
      %35 = math.exp %34 : vector<8x128xf32>
      %cst_15 = arith.constant dense<0.000000e+00> : vector<8xf32>
      %36 = vector.multi_reduction <add>, %35, %cst_15 [1] : vector<8x128xf32> to vector<8xf32>
      %37 = vector.shape_cast %36 : vector<8xf32> to vector<8x1xf32>
      %38 = math.log %37 : vector<8x1xf32>
      %39 = vector.broadcast %38 : vector<8x1xf32> to vector<8x128xf32>
      %40 = arith.subf %34, %39 : vector<8x128xf32>
      %41 = vector.broadcast %37 : vector<8x1xf32> to vector<8x128xf32>
      %42 = arith.divf %35, %41 : vector<8x128xf32>
      %cst_16 = arith.constant dense<0xFF800000> : vector<8xf32>
      %43 = vector.multi_reduction <maximumf>, %8, %cst_16 [1] : vector<8x128xf32> to vector<8xf32>
      %44 = vector.shape_cast %43 : vector<8xf32> to vector<8x1xf32>
      %45 = vector.broadcast %44 : vector<8x1xf32> to vector<8x128xf32>
      %46 = arith.subf %8, %45 : vector<8x128xf32>
      %47 = math.exp %46 : vector<8x128xf32>
      %cst_17 = arith.constant dense<0.000000e+00> : vector<8xf32>
      %48 = vector.multi_reduction <add>, %47, %cst_17 [1] : vector<8x128xf32> to vector<8xf32>
      %49 = vector.shape_cast %48 : vector<8xf32> to vector<8x1xf32>
      %50 = math.log %49 : vector<8x1xf32>
      %51 = vector.broadcast %50 : vector<8x1xf32> to vector<8x128xf32>
      %52 = arith.subf %46, %51 : vector<8x128xf32>
      %53 = vector.broadcast %49 : vector<8x1xf32> to vector<8x128xf32>
      %54 = arith.divf %47, %53 : vector<8x128xf32>
      %55 = arith.addf %28, %40 : vector<8x128xf32>
      %56 = arith.addf %55, %52 : vector<8x128xf32>
      %57 = arith.maximumf %6, %7 : vector<8x128xf32>
      %58 = arith.addf %6, %7 : vector<8x128xf32>
      %59 = arith.maximumf %57, %8 : vector<8x128xf32>
      %60 = arith.addf %58, %8 : vector<8x128xf32>
      %cst_18 = arith.constant 0.333333343 : f32
      %61 = vector.broadcast %cst_18 : f32 to vector<8x128xf32>
      %62 = arith.mulf %60, %61 : vector<8x128xf32>
      %cst_19 = arith.constant -3.000000e+01 : f32
      %63 = vector.broadcast %cst_19 : f32 to vector<8x128xf32>
      %64 = arith.mulf %63, %5 : vector<8x128xf32>
      %65 = arith.mulf %62, %18 : vector<8x128xf32>
      %66 = arith.addf %64, %65 : vector<8x128xf32>
      %cst_20 = arith.constant dense<0xFF800000> : vector<8xf32>
      %67 = vector.multi_reduction <maximumf>, %66, %cst_20 [1] : vector<8x128xf32> to vector<8xf32>
      %68 = vector.shape_cast %67 : vector<8xf32> to vector<8x1xf32>
      %69 = vector.broadcast %68 : vector<8x1xf32> to vector<8x128xf32>
      %70 = arith.cmpf oeq, %66, %69 : vector<8x128xf32>
      %c128_i32 = arith.constant 128 : i32
      %71 = vector.broadcast %c128_i32 : i32 to vector<8x128xi32>
      %72 = arith.select %70, %1, %71 : vector<8x128xi1>, vector<8x128xi32>
      %cst_21 = arith.constant dense<2147483647> : vector<8xi32>
      %73 = vector.multi_reduction <minsi>, %72, %cst_21 [1] : vector<8x128xi32> to vector<8xi32>
      %74 = vector.shape_cast %73 : vector<8xi32> to vector<8x1xi32>
      %75 = vector.broadcast %74 : vector<8x1xi32> to vector<8x128xi32>
      %76 = arith.cmpi eq, %1, %75 : vector<8x128xi32>
      %77 = arith.extui %76 : vector<8x128xi1> to vector<8x128xi32>
      %78 = arith.sitofp %77 : vector<8x128xi32> to vector<8x128xf32>
      %cst_22 = arith.constant 1.000000e+00 : f32
      %79 = vector.broadcast %cst_22 : f32 to vector<8x128xf32>
      %80 = arith.subf %79, %78 : vector<8x128xf32>
      %81 = arith.mulf %59, %80 : vector<8x128xf32>
      %82 = arith.mulf %81, %18 : vector<8x128xf32>
      %83 = arith.mulf %66, %78 : vector<8x128xf32>
      %84 = arith.addf %82, %83 : vector<8x128xf32>
      %cst_23 = arith.constant dense<0xFF800000> : vector<8xf32>
      %85 = vector.multi_reduction <maximumf>, %84, %cst_23 [1] : vector<8x128xf32> to vector<8xf32>
      %86 = vector.shape_cast %85 : vector<8xf32> to vector<8x1xf32>
      %87 = vector.broadcast %86 : vector<8x1xf32> to vector<8x128xf32>
      %88 = arith.subf %84, %87 : vector<8x128xf32>
      %89 = math.exp %88 : vector<8x128xf32>
      %cst_24 = arith.constant dense<0.000000e+00> : vector<8xf32>
      %90 = vector.multi_reduction <add>, %89, %cst_24 [1] : vector<8x128xf32> to vector<8xf32>
      %91 = vector.shape_cast %90 : vector<8xf32> to vector<8x1xf32>
      %92 = math.log %91 : vector<8x1xf32>
      %93 = vector.broadcast %92 : vector<8x1xf32> to vector<8x128xf32>
      %94 = arith.subf %88, %93 : vector<8x128xf32>
      %95 = vector.broadcast %91 : vector<8x1xf32> to vector<8x128xf32>
      %96 = arith.divf %89, %95 : vector<8x128xf32>
      %97 = arith.mulf %6, %18 : vector<8x128xf32>
      %cst_25 = arith.constant -3.000000e+01 : f32
      %98 = vector.broadcast %cst_25 : f32 to vector<8x128xf32>
      %99 = arith.mulf %98, %5 : vector<8x128xf32>
      %100 = arith.addf %97, %99 : vector<8x128xf32>
      %cst_26 = arith.constant dense<0xFF800000> : vector<8xf32>
      %101 = vector.multi_reduction <maximumf>, %100, %cst_26 [1] : vector<8x128xf32> to vector<8xf32>
      %102 = vector.shape_cast %101 : vector<8xf32> to vector<8x1xf32>
      %103 = vector.broadcast %102 : vector<8x1xf32> to vector<8x128xf32>
      %104 = arith.subf %100, %103 : vector<8x128xf32>
      %105 = math.exp %104 : vector<8x128xf32>
      %cst_27 = arith.constant dense<0.000000e+00> : vector<8xf32>
      %106 = vector.multi_reduction <add>, %105, %cst_27 [1] : vector<8x128xf32> to vector<8xf32>
      %107 = vector.shape_cast %106 : vector<8xf32> to vector<8x1xf32>
      %108 = math.log %107 : vector<8x1xf32>
      %109 = vector.broadcast %108 : vector<8x1xf32> to vector<8x128xf32>
      %110 = arith.subf %104, %109 : vector<8x128xf32>
      %111 = arith.mulf %7, %18 : vector<8x128xf32>
      %cst_28 = arith.constant -3.000000e+01 : f32
      %112 = vector.broadcast %cst_28 : f32 to vector<8x128xf32>
      %113 = arith.mulf %112, %5 : vector<8x128xf32>
      %114 = arith.addf %111, %113 : vector<8x128xf32>
      %cst_29 = arith.constant dense<0xFF800000> : vector<8xf32>
      %115 = vector.multi_reduction <maximumf>, %114, %cst_29 [1] : vector<8x128xf32> to vector<8xf32>
      %116 = vector.shape_cast %115 : vector<8xf32> to vector<8x1xf32>
      %117 = vector.broadcast %116 : vector<8x1xf32> to vector<8x128xf32>
      %118 = arith.subf %114, %117 : vector<8x128xf32>
      %119 = math.exp %118 : vector<8x128xf32>
      %cst_30 = arith.constant dense<0.000000e+00> : vector<8xf32>
      %120 = vector.multi_reduction <add>, %119, %cst_30 [1] : vector<8x128xf32> to vector<8xf32>
      %121 = vector.shape_cast %120 : vector<8xf32> to vector<8x1xf32>
      %122 = math.log %121 : vector<8x1xf32>
      %123 = vector.broadcast %122 : vector<8x1xf32> to vector<8x128xf32>
      %124 = arith.subf %118, %123 : vector<8x128xf32>
      %125 = arith.addf %110, %124 : vector<8x128xf32>
      %126 = arith.mulf %8, %18 : vector<8x128xf32>
      %cst_31 = arith.constant -3.000000e+01 : f32
      %127 = vector.broadcast %cst_31 : f32 to vector<8x128xf32>
      %128 = arith.mulf %127, %5 : vector<8x128xf32>
      %129 = arith.addf %126, %128 : vector<8x128xf32>
      %cst_32 = arith.constant dense<0xFF800000> : vector<8xf32>
      %130 = vector.multi_reduction <maximumf>, %129, %cst_32 [1] : vector<8x128xf32> to vector<8xf32>
      %131 = vector.shape_cast %130 : vector<8xf32> to vector<8x1xf32>
      %132 = vector.broadcast %131 : vector<8x1xf32> to vector<8x128xf32>
      %133 = arith.subf %129, %132 : vector<8x128xf32>
      %134 = math.exp %133 : vector<8x128xf32>
      %cst_33 = arith.constant dense<0.000000e+00> : vector<8xf32>
      %135 = vector.multi_reduction <add>, %134, %cst_33 [1] : vector<8x128xf32> to vector<8xf32>
      %136 = vector.shape_cast %135 : vector<8xf32> to vector<8x1xf32>
      %137 = math.log %136 : vector<8x1xf32>
      %138 = vector.broadcast %137 : vector<8x1xf32> to vector<8x128xf32>
      %139 = arith.subf %133, %138 : vector<8x128xf32>
      %140 = arith.addf %125, %139 : vector<8x128xf32>
      %cst_34 = arith.constant 0.000000e+00 : f32
      %141 = vector.broadcast %cst_34 : f32 to vector<8x128xf32>
      %142 = arith.subf %141, %5 : vector<8x128xf32>
      %143 = arith.mulf %142, %56 : vector<8x128xf32>
      %cst_35 = arith.constant 0.000000e+00 : f32
      %144 = vector.broadcast %cst_35 : f32 to vector<8x128xf32>
      %145 = arith.cmpf ogt, %96, %144 : vector<8x128xf32>
      %cst_36 = arith.constant 3.000000e+00 : f32
      %146 = vector.broadcast %cst_36 : f32 to vector<8x128xf32>
      %147 = arith.mulf %146, %94 : vector<8x128xf32>
      %148 = arith.subf %147, %140 : vector<8x128xf32>
      %149 = arith.mulf %96, %148 : vector<8x128xf32>
      %cst_37 = arith.constant 0.000000e+00 : f32
      %150 = vector.broadcast %cst_37 : f32 to vector<8x128xf32>
      %151 = arith.select %145, %149, %150 : vector<8x128xi1>, vector<8x128xf32>
      %cst_38 = arith.constant 1.000000e+01 : f32
      %152 = vector.broadcast %cst_38 : f32 to vector<8x128xf32>
      %153 = arith.mulf %152, %151 : vector<8x128xf32>
      %154 = arith.addf %143, %153 : vector<8x128xf32>
      %cst_39 = arith.constant 0.000000e+00 : f32
      %155 = vector.broadcast %cst_39 : f32 to vector<8x128xf32>
      %156 = arith.cmpf ogt, %30, %155 : vector<8x128xf32>
      %cst_40 = arith.constant 3.000000e+00 : f32
      %157 = vector.broadcast %cst_40 : f32 to vector<8x128xf32>
      %158 = arith.mulf %157, %28 : vector<8x128xf32>
      %159 = arith.subf %158, %56 : vector<8x128xf32>
      %160 = arith.mulf %30, %159 : vector<8x128xf32>
      %cst_41 = arith.constant 0.000000e+00 : f32
      %161 = vector.broadcast %cst_41 : f32 to vector<8x128xf32>
      %162 = arith.select %156, %160, %161 : vector<8x128xi1>, vector<8x128xf32>
      %163 = arith.addf %154, %162 : vector<8x128xf32>
      %cst_42 = arith.constant 0.000000e+00 : f32
      %164 = vector.broadcast %cst_42 : f32 to vector<8x128xf32>
      %165 = arith.cmpf ogt, %42, %164 : vector<8x128xf32>
      %cst_43 = arith.constant 3.000000e+00 : f32
      %166 = vector.broadcast %cst_43 : f32 to vector<8x128xf32>
      %167 = arith.mulf %166, %40 : vector<8x128xf32>
      %168 = arith.subf %167, %56 : vector<8x128xf32>
      %169 = arith.mulf %42, %168 : vector<8x128xf32>
      %cst_44 = arith.constant 0.000000e+00 : f32
      %170 = vector.broadcast %cst_44 : f32 to vector<8x128xf32>
      %171 = arith.select %165, %169, %170 : vector<8x128xi1>, vector<8x128xf32>
      %172 = arith.addf %163, %171 : vector<8x128xf32>
      %cst_45 = arith.constant 0.000000e+00 : f32
      %173 = vector.broadcast %cst_45 : f32 to vector<8x128xf32>
      %174 = arith.cmpf ogt, %54, %173 : vector<8x128xf32>
      %cst_46 = arith.constant 3.000000e+00 : f32
      %175 = vector.broadcast %cst_46 : f32 to vector<8x128xf32>
      %176 = arith.mulf %175, %52 : vector<8x128xf32>
      %177 = arith.subf %176, %56 : vector<8x128xf32>
      %178 = arith.mulf %54, %177 : vector<8x128xf32>
      %cst_47 = arith.constant 0.000000e+00 : f32
      %179 = vector.broadcast %cst_47 : f32 to vector<8x128xf32>
      %180 = arith.select %174, %178, %179 : vector<8x128xi1>, vector<8x128xf32>
      %181 = arith.addf %172, %180 : vector<8x128xf32>
      %182 = vector.shape_cast %181 : vector<8x128xf32> to vector<1x8x128xf32>
      %cst_48 = arith.constant dense<0.000000e+00> : vector<1xf32>
      %183 = vector.multi_reduction <add>, %182, %cst_48 [1, 2] : vector<1x8x128xf32> to vector<1xf32>
      %184 = vector.shape_cast %183 : vector<1xf32> to vector<1x1x1xf32>
      %185 = vector.extract %184[0, 0, 0] : f32 from vector<1x1x1xf32>
      %cst_49 = arith.constant 1.250000e-01 : f32
      %186 = arith.mulf %185, %cst_49 : f32
      %cst_50 = arith.constant 0.000000e+00 : f32
      %187 = vector.broadcast %cst_50 : f32 to vector<1x8x128xf32>
      %188 = vector.broadcast %186 : f32 to vector<1x8x128xf32>
      %189 = arith.addf %187, %188 : vector<1x8x128xf32>
      %c0_51 = arith.constant 0 : index
      %c0_52 = arith.constant 0 : index
      %c0_53 = arith.constant 0 : index
      %190 = vector.load %arg7[%c0_51, %c0_52, %c0_53] : memref<1x8x128xf32, #tpu.memory_space<vmem>>, vector<1x8x128xf32>
      tpu.vector_store %arg7[%c0_51, %c0_52, %c0_53], %189 {strides = array<i32>} : memref<1x8x128xf32, #tpu.memory_space<vmem>>, vector<1x8x128xf32>,
    } else {
    }
    return
  }
  func.func @transform_0(%arg0: i32, %arg1: memref<1xi32, #tpu.memory_space<smem>>) -> (i32, i32) {
    %c0_i32 = arith.constant 0 : i32
    %c0_i32_0 = arith.constant 0 : i32
    return %arg0, %c0_i32 : i32, i32
  }
  func.func @transform_1(%arg0: i32, %arg1: memref<1xi32, #tpu.memory_space<smem>>) -> (i32, i32) {
    %c0_i32 = arith.constant 0 : i32
    %c0_i32_0 = arith.constant 0 : i32
    return %arg0, %c0_i32 : i32, i32
  }
  func.func @transform_2(%arg0: i32, %arg1: memref<1xi32, #tpu.memory_space<smem>>) -> (i32, i32) {
    %c0_i32 = arith.constant 0 : i32
    %c0_i32_0 = arith.constant 0 : i32
    return %arg0, %c0_i32 : i32, i32
  }
  func.func @transform_3(%arg0: i32, %arg1: memref<1xi32, #tpu.memory_space<smem>>) -> (i32, i32) {
    %c0_i32 = arith.constant 0 : i32
    %c0_i32_0 = arith.constant 0 : i32
    return %arg0, %c0_i32 : i32, i32
  }
  func.func @transform_4(%arg0: i32, %arg1: memref<1xi32, #tpu.memory_space<smem>>) -> (i32, i32) {
    %c0_i32 = arith.constant 0 : i32
    %c0_i32_0 = arith.constant 0 : i32
    %c0_i32_1 = arith.constant 0 : i32
    return %c0_i32, %c0_i32_0 : i32, i32
  }
  func.func @transform_5(%arg0: i32, %arg1: memref<1xi32, #tpu.memory_space<smem>>) -> (i32, i32, i32) {
    %c0_i32 = arith.constant 0 : i32
    %c0_i32_0 = arith.constant 0 : i32
    %c0_i32_1 = arith.constant 0 : i32
    return %arg0, %c0_i32, %c0_i32_0 : i32, i32, i32
  }
}

</mosaic_0001>

<llo_original>
// kernel: tpu_custom_call.1
$region0: #{tpu_custom_call.1}
  #allocation0 [shape = 'u32[]', space=smem, size = 0x4, offset = 0x4, fixed_abs, tag = 'smem constant byte address 0x4 - core index']
  #allocation1 [shape = 'u32[144,128]{1,0:T(1,128)}', space=vmem, size = 0x12000, scoped, tag = 'internal scratch']
  #allocation2 [shape = 's32[1]{0}', space=sflag, size = 0x4, scoped, tag = 'scoped memory for tpu_custom_call.1']
  #allocation3 [shape = 's32[1]{0:T(128)S(6)}', space=smem, size = 0x200, scoped, tag = 'prefetched SMEM operand 0']
  %s0 = inlined_call_operand.<no memory space> [shape: s32[1], index: 0, kind: input, shape index: {}]
  %s1 = inlined_call_operand.vmem [shape: s32[8,1], index: 1, kind: input, shape index: {}]
  %s2 = inlined_call_operand.vmem [shape: f32[8,128], index: 2, kind: input, shape index: {}]
  %s3 = inlined_call_operand.vmem [shape: f32[8,128], index: 3, kind: input, shape index: {}]
  %s4 = inlined_call_operand.vmem [shape: f32[8,128], index: 4, kind: input, shape index: {}]
  %s5 = inlined_call_operand.vmem [shape: f32[1,128], index: 5, kind: input, shape index: {}]
  %s6 = inlined_call_operand.hbm [shape: f32[1,8,128], index: 6, kind: output, shape index: {}]
  %s7 = sld [smem:[#allocation0]]
  $region38: #{tpu_custom_call.1} parent=0
    _
  %s9 = ssub.s32 1, %s7
  %s10 = scalar_select 0, %s9, %s7
  %11 = sst [smem:[#allocation3]] %s0
  $region1: #{tpu_custom_call.1} parent=0
    #allocation4 [shape = 'u8[4096]{0}', space=vmem, size = 0x1000, scoped, tag = 'output window, operand 0, single buffered']
    #allocation5 [shape = 's32[1]{0}', space=sflag, size = 0x4, scoped, tag = 'scoped memory for tpu_custom_call.1']
    %12 = vsyncpa [#allocation5], 0
    // Predicated region
    $region2: #{tpu_custom_call.1} parent=1 // pred_check
      _
    $region3: #{tpu_custom_call.1} parent=1 // pred_check_branch
      %14 = sbr.rel (0) target = $region5
    $region4: #{tpu_custom_call.1} parent=1 // pred_region
      _
    $region5: #{tpu_custom_call.1} parent=1 // pred_fallthru
      _
    // Predicated region
    $region6: #{tpu_custom_call.1} parent=1 // pred_check
      _
    $region7: #{tpu_custom_call.1} parent=1 // pred_check_branch
      %16 = sbr.rel (0) target = $region9
    $region8: #{tpu_custom_call.1} parent=1 // pred_region
      _
    $region9: #{tpu_custom_call.1} parent=1 // pred_fallthru
      _
    // Predicated region
    $region10: #{tpu_custom_call.1} parent=1 // pred_check
      _
    $region11: #{tpu_custom_call.1} parent=1 // pred_check_branch
      %18 = sbr.rel (0) target = $region13
    $region12: #{tpu_custom_call.1} parent=1 // pred_region
      _
    $region13: #{tpu_custom_call.1} parent=1 // pred_fallthru
      _
    // Predicated region
    $region14: #{tpu_custom_call.1} parent=1 // pred_check
      _
    $region15: #{tpu_custom_call.1} parent=1 // pred_check_branch
      %20 = sbr.rel (0) target = $region17
    $region16: #{tpu_custom_call.1} parent=1 // pred_region
      _
    $region17: #{tpu_custom_call.1} parent=1 // pred_fallthru
      _
    // Predicated region
    $region18: #{tpu_custom_call.1} parent=1 // pred_check
      _
    $region19: #{tpu_custom_call.1} parent=1 // pred_check_branch
      %22 = sbr.rel (0) target = $region21
    $region20: #{tpu_custom_call.1} parent=1 // pred_region
      _
    $region21: #{tpu_custom_call.1} parent=1 // pred_fallthru
      _
    %v23 = vld [vmem:[%s1] sm:$0xff]
    %v24 = vlaneseq
    %v25 = vand.u32 %v24, 127
    %26 = vset.pattern.permute.xlu0 0
    %27 = vperm.xlu0 %26, %v23
    %v28 = vpop.permute.xlu0 %27
    %vm29 = vcmp.eq.s32.totalorder %v25, %v28
    %v30 = vsel %vm29, 1, 0
    %v31 = vcvt.s32.f32 %v30
    %v32 = vld [vmem:[%s2] sm:$0xff]
    %v33 = vld [vmem:[%s3] sm:$0xff]
    %v34 = vld [vmem:[%s4] sm:$0xff]
    %s35 = sld [smem:[#allocation3]]
    %p36 = scmp.gt.s32.totalorder %s35, 0
    // Predicated region
    $region22: #{tpu_custom_call.1} parent=1 // pred_check
      %p37 = pneg %p36
    $region23: #{tpu_custom_call.1} parent=1 // pred_check_branch
      %39 = sbr.rel (%p37) target = $region25
    $region24: #{tpu_custom_call.1} parent=1 // pred_region
      %v40 = vld [vmem:[%s5] sm:$0x1]
      %v42 = vlaneseq
      %v43 = vshrl.u32 %v42, 7
      %v44 = vsub.s32 0, %v43
      %v45 = vrot.slane %v40, %v44
      %v47 = vadd.f32 %v32, %v45
      %48 = vmax.xlane.f32.xlu0 %v47
      %v49 = vpop.xlane.xlu0 %48
      %v50 = vsub.f32 %v47, %v49
      %v51 = vmul.f32 %v50, 1.442695
      %v52 = vpow.pop %v51
      %53 = vadd.xlane.f32.xlu0 %v52
      %v54 = vpop.xlane.xlu0 %53
      %v55 = vlog2.pop %v54
      %v56 = vmul.f32 %v55, 0.6931472
      %v57 = vsub.f32 %v50, %v56
      %v58 = vmul.f32 %v31, %v57
      %v59 = vsub.f32 0.0, %v58
      %v60 = vadd.f32 %v33, %v45
      %61 = vmax.xlane.f32.xlu0 %v60
      %v62 = vpop.xlane.xlu0 %61
      %v63 = vsub.f32 %v60, %v62
      %v64 = vmul.f32 %v63, 1.442695
      %v65 = vpow.pop %v64
      %66 = vadd.xlane.f32.xlu0 %v65
      %v67 = vpop.xlane.xlu0 %66
      %v68 = vlog2.pop %v67
      %v69 = vmul.f32 %v68, 0.6931472
      %v70 = vsub.f32 %v63, %v69
      %v71 = vmul.f32 %v31, %v70
      %v72 = vsub.f32 %v59, %v71
      %v73 = vadd.f32 %v34, %v45
      %74 = vmax.xlane.f32.xlu0 %v73
      %v75 = vpop.xlane.xlu0 %74
      %v76 = vsub.f32 %v73, %v75
      %v77 = vmul.f32 %v76, 1.442695
      %v78 = vpow.pop %v77
      %79 = vadd.xlane.f32.xlu0 %v78
      %v80 = vpop.xlane.xlu0 %79
      %v81 = vlog2.pop %v80
      %v82 = vmul.f32 %v81, 0.6931472
      %v83 = vsub.f32 %v76, %v82
      %v84 = vmul.f32 %v31, %v83
      %v85 = vsub.f32 %v72, %v84
      %86 = vadd.xlane.f32.xlu0 %v85
      %v87 = vpop.xlane.xlu0 %86
      %v88 = vrot.slane %v87, 4
      %v89 = vadd.f32 %v87, %v88
      %v90 = vrot.slane %v89, 2
      %v91 = vadd.f32 %v89, %v90
      %v92 = vrot.slane %v91, 1
      %v93 = vadd.f32 %v91, %v92
      %s94 = vtos %v93
      %s95 = smul.f32 %s94, 0.125
      %v96 = vstv %s95
      %v97 = vadd.f32 %v96, 0.0
      %98 = vst [vmem:[#allocation4] sm:$0xff] %v97
    $region25: #{tpu_custom_call.1} parent=1 // pred_fallthru
      _
    %s99 = sld [smem:[#allocation3]]
    %p100 = scmp.eq.s32.totalorder %s99, 0
    // Predicated region
    $region26: #{tpu_custom_call.1} parent=1 // pred_check
      %p101 = pneg %p100
    $region27: #{tpu_custom_call.1} parent=1 // pred_check_branch
      %103 = sbr.rel (%p101) target = $region29
    $region28: #{tpu_custom_call.1} parent=1 // pred_region
      %v104 = vsub.f32 1.0, %v31
      %105 = vmax.xlane.f32.xlu0 %v32
      %v106 = vpop.xlane.xlu0 %105
      %v107 = vsub.f32 %v32, %v106
      %v108 = vmul.f32 %v107, 1.442695
      %v109 = vpow.pop %v108
      %110 = vadd.xlane.f32.xlu0 %v109
      %v111 = vpop.xlane.xlu0 %110
      %v112 = vlog2.pop %v111
      %v113 = vmul.f32 %v112, 0.6931472
      %v114 = vsub.f32 %v107, %v113
      %v115 = vrcp.pop %v111
      %v116 = vmul.f32 %v109, %v115
      %117 = vmax.xlane.f32.xlu0 %v33
      %v118 = vpop.xlane.xlu0 %117
      %v119 = vsub.f32 %v33, %v118
      %v120 = vmul.f32 %v119, 1.442695
      %v121 = vpow.pop %v120
      %122 = vadd.xlane.f32.xlu0 %v121
      %v123 = vpop.xlane.xlu0 %122
      %v124 = vlog2.pop %v123
      %v125 = vmul.f32 %v124, 0.6931472
      %v126 = vsub.f32 %v119, %v125
      %v127 = vrcp.pop %v123
      %v128 = vmul.f32 %v121, %v127
      %129 = vmax.xlane.f32.xlu0 %v34
      %v130 = vpop.xlane.xlu0 %129
      %v131 = vsub.f32 %v34, %v130
      %v132 = vmul.f32 %v131, 1.442695
      %v133 = vpow.pop %v132
      %134 = vadd.xlane.f32.xlu0 %v133
      %v135 = vpop.xlane.xlu0 %134
      %v136 = vlog2.pop %v135
      %v137 = vmul.f32 %v136, 0.6931472
      %v138 = vsub.f32 %v131, %v137
      %v139 = vrcp.pop %v135
      %v140 = vmul.f32 %v133, %v139
      %v141 = vadd.f32 %v114, %v126
      %v142 = vadd.f32 %v141, %v138
      %v143 = vmax.f32 %v32, %v33
      %v144 = vadd.f32 %v32, %v33
      %v145 = vmax.f32 %v143, %v34
      %v146 = vadd.f32 %v144, %v34
      %v147 = vmul.f32 %v146, 0.33333334
      %v148 = vmul.f32 %v31, -30.0
      %v149 = vmul.f32 %v147, %v104
      %v150 = vadd.f32 %v148, %v149
      %151 = vmax.xlane.f32.xlu0 %v150
      %v152 = vpop.xlane.xlu0 %151
      %vm153 = vcmp.eq.f32.partialorder %v150, %v152
      %v154 = vsel %vm153, %v25, 128
      %v155 = vand.u32 %v154, 65535
      %v156 = vshra.s32 %v154, 16
      %v157 = vcvt.s32.f32 %v155
      %v158 = vcvt.s32.f32 %v156
      %159 = vmin.xlane.f32.xlu0 %v158
      %v160 = vpop.xlane.xlu0 %159
      %vm161 = vcmp.eq.f32.partialorder %v158, %v160
      %v162 = vsel %vm161, %v157, inf
      %163 = vmin.xlane.f32.xlu0 %v162
      %v164 = vpop.xlane.xlu0 %163
      %v165 = vcvt.f32.s32 %v164
      %v166 = vcvt.f32.s32 %v160
      %v167 = vshll.u32 %v166, 16
      %v168 = vadd.s32 %v167, %v165
      %vm169 = vcmp.eq.s32.totalorder %v25, %v168
      %v170 = vsel %vm169, 1, 0
      %v171 = vcvt.s32.f32 %v170
      %v172 = vsub.f32 1.0, %v171
      %v173 = vmul.f32 %v145, %v172
      %v174 = vmul.f32 %v173, %v104
      %v175 = vmul.f32 %v150, %v171
      %v176 = vadd.f32 %v174, %v175
      %177 = vmax.xlane.f32.xlu0 %v176
      %v178 = vpop.xlane.xlu0 %177
      %v179 = vsub.f32 %v176, %v178
      %v180 = vmul.f32 %v179, 1.442695
      %v181 = vpow.pop %v180
      %182 = vadd.xlane.f32.xlu0 %v181
      %v183 = vpop.xlane.xlu0 %182
      %v184 = vlog2.pop %v183
      %v185 = vmul.f32 %v184, 0.6931472
      %v186 = vsub.f32 %v179, %v185
      %v187 = vrcp.pop %v183
      %v188 = vmul.f32 %v181, %v187
      %v189 = vmul.f32 %v32, %v104
      %v190 = vadd.f32 %v189, %v148
      %191 = vmax.xlane.f32.xlu0 %v190
      %v192 = vpop.xlane.xlu0 %191
      %v193 = vsub.f32 %v190, %v192
      %v194 = vmul.f32 %v193, 1.442695
      %v195 = vpow.pop %v194
      %196 = vadd.xlane.f32.xlu0 %v195
      %v197 = vpop.xlane.xlu0 %196
      %v198 = vlog2.pop %v197
      %v199 = vmul.f32 %v198, 0.6931472
      %v200 = vsub.f32 %v193, %v199
      %v201 = vmul.f32 %v33, %v104
      %v202 = vadd.f32 %v201, %v148
      %203 = vmax.xlane.f32.xlu0 %v202
      %v204 = vpop.xlane.xlu0 %203
      %v205 = vsub.f32 %v202, %v204
      %v206 = vmul.f32 %v205, 1.442695
      %v207 = vpow.pop %v206
      %208 = vadd.xlane.f32.xlu0 %v207
      %v209 = vpop.xlane.xlu0 %208
      %v210 = vlog2.pop %v209
      %v211 = vmul.f32 %v210, 0.6931472
      %v212 = vsub.f32 %v205, %v211
      %v213 = vadd.f32 %v200, %v212
      %v214 = vmul.f32 %v34, %v104
      %v215 = vadd.f32 %v214, %v148
      %216 = vmax.xlane.f32.xlu0 %v215
      %v217 = vpop.xlane.xlu0 %216
      %v218 = vsub.f32 %v215, %v217
      %v219 = vmul.f32 %v218, 1.442695
      %v220 = vpow.pop %v219
      %221 = vadd.xlane.f32.xlu0 %v220
      %v222 = vpop.xlane.xlu0 %221
      %v223 = vlog2.pop %v222
      %v224 = vmul.f32 %v223, 0.6931472
      %v225 = vsub.f32 %v218, %v224
      %v226 = vadd.f32 %v213, %v225
      %v227 = vsub.f32 0.0, %v31
      %v228 = vmul.f32 %v227, %v142
      %vm229 = vcmp.gt.f32.partialorder %v188, 0.0
      %v230 = vmul.f32 %v186, 3.0
      %v231 = vsub.f32 %v230, %v226
      %v232 = vmul.f32 %v188, %v231
      %v233 = vsel %vm229, %v232, 0.0
      %v234 = vmul.f32 %v233, 10.0
      %v235 = vadd.f32 %v228, %v234
      %vm236 = vcmp.gt.f32.partialorder %v116, 0.0
      %v237 = vmul.f32 %v114, 3.0
      %v238 = vsub.f32 %v237, %v142
      %v239 = vmul.f32 %v116, %v238
      %v240 = vsel %vm236, %v239, 0.0
      %v241 = vadd.f32 %v235, %v240
      %vm242 = vcmp.gt.f32.partialorder %v128, 0.0
      %v243 = vmul.f32 %v126, 3.0
      %v244 = vsub.f32 %v243, %v142
      %v245 = vmul.f32 %v128, %v244
      %v246 = vsel %vm242, %v245, 0.0
      %v247 = vadd.f32 %v241, %v246
      %vm248 = vcmp.gt.f32.partialorder %v140, 0.0
      %v249 = vmul.f32 %v138, 3.0
      %v250 = vsub.f32 %v249, %v142
      %v251 = vmul.f32 %v140, %v250
      %v252 = vsel %vm248, %v251, 0.0
      %v253 = vadd.f32 %v247, %v252
      %254 = vadd.xlane.f32.xlu0 %v253
      %v255 = vpop.xlane.xlu0 %254
      %v256 = vrot.slane %v255, 4
      %v257 = vadd.f32 %v255, %v256
      %v258 = vrot.slane %v257, 2
      %v259 = vadd.f32 %v257, %v258
      %v260 = vrot.slane %v259, 1
      %v261 = vadd.f32 %v259, %v260
      %s262 = vtos %v261
      %s263 = smul.f32 %s262, 0.125
      %v264 = vstv %s263
      %v265 = vadd.f32 %v264, 0.0
      %266 = vst [vmem:[#allocation4] sm:$0xff] %v265
    $region29: #{tpu_custom_call.1} parent=1 // pred_fallthru
      _
    // Predicated region
    $region30: #{tpu_custom_call.1} parent=1 // pred_check
      _
    $region31: #{tpu_custom_call.1} parent=1 // pred_check_branch
      %268 = sbr.rel (0) target = $region33
    $region32: #{tpu_custom_call.1} parent=1 // pred_region
      %s270 = ssub.s32 128, 128
      %271 = vsyncadd [#allocation5], %s270
      %s273 = sshll.u32 [#allocation4], 4
      %s274 = int_to_ptr.vmem [resolvable:$true] %s273
      %276 = dma.vmem_to_hbm [thread:$0]  %s274, 128, %s6, [#allocation5]
    $region33: #{tpu_custom_call.1} parent=1 // pred_fallthru
      _
    // Predicated region
    $region34: #{tpu_custom_call.1} parent=1 // pred_check
      _
    $region35: #{tpu_custom_call.1} parent=1 // pred_check_branch
      %278 = sbr.rel (0) target = $region37
    $region36: #{tpu_custom_call.1} parent=1 // pred_region
      %279 = dma.done [#allocation5], 128
    $region37: #{tpu_custom_call.1} parent=1 // pred_fallthru
      _
    %280 = vsyncpa [#allocation5], 1

</llo_original>
